<compile_context>
chip_gen: v7x
topology: tpu7x:2x2x1
jax: 0.10.0
libtpu: 0.0.40
codegen_flags: <defaults>
</compile_context>

<pallas_src>
import jax
import jax.numpy as jnp
from jax import lax
from jax.experimental import pallas as pl
from jax.experimental.pallas import tpu as pltpu

NUM_CLASSES = 2
_MAX_FINITE_BITS = 0x7F7FFFFF   # bit pattern of the largest finite float32
_BISECT_ITERS = 32              # search space < 2^31 -> 31 iterations suffice (+1 margin)


def _sum11(x):
    """Reduce a 2-D array to a (1, 1) tile (lane reduce, then sublane reduce)."""
    return jnp.sum(jnp.sum(x, axis=1, keepdims=True), axis=0, keepdims=True)


def _max11(x):
    return jnp.max(jnp.max(x, axis=1, keepdims=True), axis=0, keepdims=True)


def _conf_loss_kernel(nneg_ref,    # SMEM (B,) int32 : min(3*num_pos, N-1) per batch row
                      packed_ref,  # VMEM (1, 24, L) f32 : [ce(8) | zeroed-ce(8) | posf(8)]
                      zbits_ref,   # VMEM (1, 8, L) int32 : bit pattern of zeroed-ce
                      out_ref):    # VMEM (1, 1, 128) f32 : lane 0 = conf sum for this row
    b = pl.program_id(0)
    nn_i = nneg_ref[b]                                        # int32 scalar
    # keep the threshold logic in (1,1)-shaped state (proven-safe lowering patterns)
    nn = nn_i.astype(jnp.float32) + jnp.zeros((1, 1), jnp.float32)

    # ---- positive-box CE contribution (one fused pass over resident data) ----------
    ce = packed_ref[0, 0:8, :]                                # (8, L)
    posf = packed_ref[0, 16:24, :]                            # (8, L)
    pos_ce = _sum11(ce * posf)                                # (1, 1)

    # ---- hard negative mining via bit-space threshold bisection --------------------
    # Find the smallest T with count(zer > float(T)) < num_neg; then float(T) is the
    # num_neg-th largest zeroed-CE of the row (padded lanes hold 0.0 and never count
    # for strict '>' against thresholds >= 0).
    def count_above(thresh_bits):                             # (1,1) i32 -> (1,1) f32
        return _sum11(jnp.where(zbits_ref[0] > thresh_bits, 1.0, 0.0))

    def body(_, carry):
        lo, hi = carry                                        # (1,1) int32 each
        mid = lo + ((hi - lo) >> 1)                           # no int32 overflow
        go_low = count_above(mid) < nn                        # (1,1) bool
        return (jnp.where(go_low, lo, mid + 1),
                jnp.where(go_low, mid, hi))

    lo0 = jnp.zeros((1, 1), jnp.int32)
    hi0 = jnp.full((1, 1), _MAX_FINITE_BITS, jnp.int32)
    _, t_bits = lax.fori_loop(0, _BISECT_ITERS, body, (lo0, hi0))

    zer = packed_ref[0, 8:16, :]                              # (8, L)
    zb = zbits_ref[0]                                         # (8, L)
    above = zb > t_bits                                       # strictly above threshold
    cnt_above = _sum11(jnp.where(above, 1.0, 0.0))            # (1,1), < num_neg
    sum_above = _sum11(jnp.where(above, zer, 0.0))            # (1,1)
    # All boxes tied at the threshold share the same CE value t (>= 0); the selection
    # among ties is count-limited, so only t itself is needed.  Extract it exactly.
    t_val = _max11(jnp.where(zb == t_bits, zer, 0.0))         # (1,1)
    hard_neg = sum_above + (nn - cnt_above) * t_val
    hard_neg = jnp.where(nn > 0.5, hard_neg, 0.0)             # num_neg == 0 -> none

    conf = pos_ce + hard_neg                                  # (1, 1)
    lane = lax.broadcasted_iota(jnp.int32, (1, 128), 1)
    out_ref[0] = jnp.where(lane == 0, conf, 0.0)


def multibox_loss(loc_preds, loc_targets, conf_preds, conf_targets):
    """loc_preds/loc_targets [B,N,4] f32, conf_preds [B,N,2] f32, conf_targets [B,N] int."""
    B, N, _ = loc_preds.shape
    f32 = jnp.float32
    lp = loc_preds.astype(f32)
    lt = loc_targets.astype(f32)
    cp = conf_preds.astype(f32)
    ct = conf_targets.astype(jnp.int32)

    pos = ct > 0                                              # (B, N)
    posf = pos.astype(f32)
    num_pos = jnp.sum(pos.astype(jnp.int32), axis=1)          # (B,)
    num_matched = jnp.sum(num_pos)
    num_neg = jnp.minimum(3 * num_pos, N - 1).astype(jnp.int32)   # (B,)

    # smooth-L1 loc term over positives: cheap elementwise + masked sum, kept in the
    # wrapper (XLA fuses it) per perf review; halves the kernel's resident stream.
    d = lp - lt
    ad = jnp.abs(d)
    sl1 = jnp.where(ad < 1.0, 0.5 * ad * ad, ad - 0.5)
    loc_sum = jnp.sum(jnp.where(pos[..., None], sl1, 0.0))

    # per-box 2-class cross-entropy via the softplus identity; positives zeroed before
    # ranking (exactly the PyTorch hard_negative_mining semantics).
    x0 = cp[..., 0]
    x1 = cp[..., 1]
    lse = jnp.maximum(x0, x1) + jnp.log1p(jnp.exp(-jnp.abs(x0 - x1)))
    ce = lse - jnp.where(ct == 1, x1, x0)                     # (B, N), >= 0
    zer = jnp.where(pos, 0.0, ce)

    # ---- pack each per-box plane into a lane+sublane dense (8, L) layout per row ----
    L = pl.cdiv(pl.cdiv(N, 8), 128) * 128
    pad = 8 * L - N

    def plane(x, v):
        xp = jnp.pad(x, ((0, 0), (0, pad)), constant_values=v) if pad else x
        return xp.reshape(B, 8, L)

    # pads: ce = 0 (never contributes), zer = 0 (never ranks above a threshold >= 0
    # under strict '>'), posf = 0 (never selected as positive).
    packed = jnp.concatenate(
        [plane(ce, 0.0), plane(zer, 0.0), plane(posf, 0.0)], axis=1)     # (B, 24, L)
    # monotone int32 key for zer (zer >= 0); computed here so the kernel needs no
    # scalar float<->int bitcast.
    zbits = lax.bitcast_convert_type(plane(zer, 0.0), jnp.int32)         # (B, 8, L)

    out = pl.pallas_call(
        _conf_loss_kernel,
        out_shape=jax.ShapeDtypeStruct((B, 1, 128), f32),
        grid_spec=pltpu.PrefetchScalarGridSpec(
            num_scalar_prefetch=1,
            grid=(B,),
            in_specs=[
                pl.BlockSpec((1, 24, L), lambda b, nn: (b, 0, 0)),
                pl.BlockSpec((1, 8, L), lambda b, nn: (b, 0, 0)),
            ],
            out_specs=pl.BlockSpec((1, 1, 128), lambda b, nn: (b, 0, 0)),
        ),
        compiler_params=pltpu.CompilerParams(
            dimension_semantics=("parallel",),          # batch rows across TCs on v7x
            vmem_limit_bytes=32 * 1024 * 1024,          # per-row stream is only ~0.4 MiB
        ),
    )(num_neg, packed, zbits)

    conf_sum = jnp.sum(out[:, 0, 0])
    total = (loc_sum + conf_sum) / jnp.maximum(num_matched.astype(f32), 1.0)
    # matches PyTorch: returns 0 when there are no matched boxes
    return jnp.where(num_matched > 0, total, jnp.float32(0.0))


def _reference(loc_preds, loc_targets, conf_preds, conf_targets):
    """Pure-JAX reference mirroring the PyTorch forward."""
    B, N, _ = loc_preds.shape
    ct = conf_targets.astype(jnp.int32)
    pos = ct > 0
    num_matched = jnp.sum(pos)

    d = loc_preds - loc_targets
    ad = jnp.abs(d)
    sl1 = jnp.where(ad < 1.0, 0.5 * ad * ad, ad - 0.5)
    loc_sum = jnp.sum(jnp.where(pos[..., None], sl1, 0.0))

    x0 = conf_preds[..., 0]
    x1 = conf_preds[..., 1]
    lse = jnp.maximum(x0, x1) + jnp.log1p(jnp.exp(-jnp.abs(x0 - x1)))
    ce = lse - jnp.where(ct == 1, x1, x0)

    zeroed = jnp.where(pos, 0.0, ce)
    order = jnp.argsort(-zeroed, axis=1)        # descending, stable
    rank = jnp.argsort(order, axis=1)
    num_pos_row = jnp.sum(pos, axis=1, keepdims=True)
    num_neg = jnp.minimum(3 * num_pos_row, N - 1)
    neg = rank < num_neg
    sel = jnp.logical_or(pos, neg)
    conf_sum = jnp.sum(jnp.where(sel, ce, 0.0))

    total = (loc_sum + conf_sum) / jnp.maximum(num_matched, 1)
    return jnp.where(num_matched > 0, total, jnp.float32(0.0))


if __name__ == "__main__":
    B, N = 2, 256  # small synthetic shapes (real model uses N=21824)
    key = jax.random.PRNGKey(0)
    k1, k2, k3, k4 = jax.random.split(key, 4)
    loc_preds = jax.random.normal(k1, (B, N, 4), dtype=jnp.float32)
    loc_targets = jax.random.normal(k2, (B, N, 4), dtype=jnp.float32)
    conf_preds = jax.random.normal(k3, (B, N, NUM_CLASSES), dtype=jnp.float32)
    conf_targets = jax.random.bernoulli(k4, 0.25, (B, N)).astype(jnp.int32)

    out = multibox_loss(loc_preds, loc_targets, conf_preds, conf_targets)
    out = jax.block_until_ready(out)
    ref = _reference(loc_preds, loc_targets, conf_preds, conf_targets)
    assert jnp.abs(out - ref) <= 1e-3 + 1e-3 * jnp.abs(ref), (out, ref)

    # edge case: one row with no positives (num_neg == 0 path inside the kernel)
    ct2 = conf_targets.at[0].set(0)
    out2 = jax.block_until_ready(multibox_loss(loc_preds, loc_targets, conf_preds, ct2))
    ref2 = _reference(loc_preds, loc_targets, conf_preds, ct2)
    assert jnp.abs(out2 - ref2) <= 1e-3 + 1e-3 * jnp.abs(ref2), (out2, ref2)

    print("KERNEL_OK")
</pallas_src>

<mosaic_0001>
module attributes {stable_mosaic.version = 11 : i64} {
  func.func @_conf_loss_kernel(%arg0: i32, %arg1: memref<2xi32, #tpu.memory_space<smem>>, %arg2: memref<1x24x128xf32, #tpu.memory_space<vmem>>, %arg3: memref<1x8x128xi32, #tpu.memory_space<vmem>>, %arg4: memref<1x1x128xf32, #tpu.memory_space<vmem>>) attributes {dimension_semantics = [#tpu.dimension_semantics<parallel>], iteration_bounds = array<i64: 2>, scalar_prefetch = 1 : i64, scratch_operands = 0 : i64, tpu.core_type = #tpu.core_type<tc>, window_params = [{transform_indices = @transform_0, window_bounds = array<i64: 1, 24, 128>}, {transform_indices = @transform_1, window_bounds = array<i64: 1, 8, 128>}, {transform_indices = @transform_2, window_bounds = array<i64: 1, 1, 128>}]} {
    %0 = arith.index_cast %arg0 : i32 to index
    %1 = memref.load %arg1[%0] : memref<2xi32, #tpu.memory_space<smem>>
    %2 = arith.sitofp %1 : i32 to f32
    %cst = arith.constant 0.000000e+00 : f32
    %3 = vector.broadcast %cst : f32 to vector<1x1xf32>
    %4 = vector.broadcast %2 : f32 to vector<1x1xf32>
    %5 = arith.addf %4, %3 : vector<1x1xf32>
    %c0 = arith.constant 0 : index
    %c0_0 = arith.constant 0 : index
    %c0_1 = arith.constant 0 : index
    %6 = vector.load %arg2[%c0, %c0_0, %c0_1] : memref<1x24x128xf32, #tpu.memory_space<vmem>>, vector<1x8x128xf32>
    %7 = vector.shape_cast %6 : vector<1x8x128xf32> to vector<8x128xf32>
    %c0_2 = arith.constant 0 : index
    %c16 = arith.constant 16 : index
    %c0_3 = arith.constant 0 : index
    %8 = vector.load %arg2[%c0_2, %c16, %c0_3] : memref<1x24x128xf32, #tpu.memory_space<vmem>>, vector<1x8x128xf32>
    %9 = vector.shape_cast %8 : vector<1x8x128xf32> to vector<8x128xf32>
    %10 = arith.mulf %7, %9 : vector<8x128xf32>
    %cst_4 = arith.constant dense<0.000000e+00> : vector<8xf32>
    %11 = vector.multi_reduction <add>, %10, %cst_4 [1] : vector<8x128xf32> to vector<8xf32>
    %12 = vector.shape_cast %11 : vector<8xf32> to vector<8x1xf32>
    %cst_5 = arith.constant dense<0.000000e+00> : vector<1xf32>
    %13 = vector.multi_reduction <add>, %12, %cst_5 [0] : vector<8x1xf32> to vector<1xf32>
    %14 = vector.shape_cast %13 : vector<1xf32> to vector<1x1xf32>
    %c0_i32 = arith.constant 0 : i32
    %15 = vector.broadcast %c0_i32 : i32 to vector<1x1xi32>
    %c2139095039_i32 = arith.constant 2139095039 : i32
    %16 = vector.broadcast %c2139095039_i32 : i32 to vector<1x1xi32>
    %c0_i32_6 = arith.constant 0 : i32
    %c32_i32 = arith.constant 32 : i32
    %17 = arith.addi %c0_i32_6, %c32_i32 : i32
    %c1_i32 = arith.constant 1 : i32
    %18:2 = scf.for %arg5 = %c0_i32_6 to %17 step %c1_i32 iter_args(%arg6 = %15, %arg7 = %16) -> (vector<1x1xi32>, vector<1x1xi32>)  : i32 {
      %64 = arith.subi %arg7, %arg6 : vector<1x1xi32>
      %c1_i32_29 = arith.constant 1 : i32
      %65 = vector.broadcast %c1_i32_29 : i32 to vector<1x1xi32>
      %66 = arith.shrsi %64, %65 : vector<1x1xi32>
      %67 = arith.addi %arg6, %66 : vector<1x1xi32>
      %c0_30 = arith.constant 0 : index
      %c0_31 = arith.constant 0 : index
      %c0_32 = arith.constant 0 : index
      %68 = vector.load %arg3[%c0_30, %c0_31, %c0_32] : memref<1x8x128xi32, #tpu.memory_space<vmem>>, vector<1x8x128xi32>
      %69 = vector.shape_cast %68 : vector<1x8x128xi32> to vector<8x128xi32>
      %70 = vector.broadcast %67 : vector<1x1xi32> to vector<8x128xi32>
      %71 = arith.cmpi sgt, %69, %70 : vector<8x128xi32>
      %cst_33 = arith.constant 1.000000e+00 : f32
      %cst_34 = arith.constant 0.000000e+00 : f32
      %72 = vector.broadcast %cst_33 : f32 to vector<8x128xf32>
      %73 = vector.broadcast %cst_34 : f32 to vector<8x128xf32>
      %74 = arith.select %71, %72, %73 : vector<8x128xi1>, vector<8x128xf32>
      %cst_35 = arith.constant dense<0.000000e+00> : vector<8xf32>
      %75 = vector.multi_reduction <add>, %74, %cst_35 [1] : vector<8x128xf32> to vector<8xf32>
      %76 = vector.shape_cast %75 : vector<8xf32> to vector<8x1xf32>
      %cst_36 = arith.constant dense<0.000000e+00> : vector<1xf32>
      %77 = vector.multi_reduction <add>, %76, %cst_36 [0] : vector<8x1xf32> to vector<1xf32>
      %78 = vector.shape_cast %77 : vector<1xf32> to vector<1x1xf32>
      %79 = arith.cmpf olt, %78, %5 : vector<1x1xf32>
      %c1_i32_37 = arith.constant 1 : i32
      %80 = vector.broadcast %c1_i32_37 : i32 to vector<1x1xi32>
      %81 = arith.addi %67, %80 : vector<1x1xi32>
      %82 = arith.select %79, %arg6, %81 : vector<1x1xi1>, vector<1x1xi32>
      %83 = arith.select %79, %67, %arg7 : vector<1x1xi1>, vector<1x1xi32>
      scf.yield %82, %83 : vector<1x1xi32>, vector<1x1xi32>
    }
    %c0_7 = arith.constant 0 : index
    %c8 = arith.constant 8 : index
    %c0_8 = arith.constant 0 : index
    %19 = vector.load %arg2[%c0_7, %c8, %c0_8] : memref<1x24x128xf32, #tpu.memory_space<vmem>>, vector<1x8x128xf32>
    %20 = vector.shape_cast %19 : vector<1x8x128xf32> to vector<8x128xf32>
    %c0_9 = arith.constant 0 : index
    %c0_10 = arith.constant 0 : index
    %c0_11 = arith.constant 0 : index
    %21 = vector.load %arg3[%c0_9, %c0_10, %c0_11] : memref<1x8x128xi32, #tpu.memory_space<vmem>>, vector<1x8x128xi32>
    %22 = vector.shape_cast %21 : vector<1x8x128xi32> to vector<8x128xi32>
    %23 = vector.broadcast %18#1 : vector<1x1xi32> to vector<8x128xi32>
    %24 = arith.cmpi sgt, %22, %23 : vector<8x128xi32>
    %cst_12 = arith.constant 1.000000e+00 : f32
    %cst_13 = arith.constant 0.000000e+00 : f32
    %25 = vector.broadcast %cst_12 : f32 to vector<8x128xf32>
    %26 = vector.broadcast %cst_13 : f32 to vector<8x128xf32>
    %27 = arith.select %24, %25, %26 : vector<8x128xi1>, vector<8x128xf32>
    %cst_14 = arith.constant dense<0.000000e+00> : vector<8xf32>
    %28 = vector.multi_reduction <add>, %27, %cst_14 [1] : vector<8x128xf32> to vector<8xf32>
    %29 = vector.shape_cast %28 : vector<8xf32> to vector<8x1xf32>
    %cst_15 = arith.constant dense<0.000000e+00> : vector<1xf32>
    %30 = vector.multi_reduction <add>, %29, %cst_15 [0] : vector<8x1xf32> to vector<1xf32>
    %31 = vector.shape_cast %30 : vector<1xf32> to vector<1x1xf32>
    %cst_16 = arith.constant 0.000000e+00 : f32
    %32 = vector.broadcast %cst_16 : f32 to vector<8x128xf32>
    %33 = arith.select %24, %20, %32 : vector<8x128xi1>, vector<8x128xf32>
    %cst_17 = arith.constant dense<0.000000e+00> : vector<8xf32>
    %34 = vector.multi_reduction <add>, %33, %cst_17 [1] : vector<8x128xf32> to vector<8xf32>
    %35 = vector.shape_cast %34 : vector<8xf32> to vector<8x1xf32>
    %cst_18 = arith.constant dense<0.000000e+00> : vector<1xf32>
    %36 = vector.multi_reduction <add>, %35, %cst_18 [0] : vector<8x1xf32> to vector<1xf32>
    %37 = vector.shape_cast %36 : vector<1xf32> to vector<1x1xf32>
    %38 = vector.broadcast %18#1 : vector<1x1xi32> to vector<8x128xi32>
    %39 = arith.cmpi eq, %22, %38 : vector<8x128xi32>
    %cst_19 = arith.constant 0.000000e+00 : f32
    %40 = vector.broadcast %cst_19 : f32 to vector<8x128xf32>
    %41 = arith.select %39, %20, %40 : vector<8x128xi1>, vector<8x128xf32>
    %cst_20 = arith.constant dense<0xFF800000> : vector<8xf32>
    %42 = vector.multi_reduction <maximumf>, %41, %cst_20 [1] : vector<8x128xf32> to vector<8xf32>
    %43 = vector.shape_cast %42 : vector<8xf32> to vector<8x1xf32>
    %cst_21 = arith.constant dense<0xFF800000> : vector<1xf32>
    %44 = vector.multi_reduction <maximumf>, %43, %cst_21 [0] : vector<8x1xf32> to vector<1xf32>
    %45 = vector.shape_cast %44 : vector<1xf32> to vector<1x1xf32>
    %46 = arith.subf %5, %31 : vector<1x1xf32>
    %47 = arith.mulf %46, %45 : vector<1x1xf32>
    %48 = arith.addf %37, %47 : vector<1x1xf32>
    %cst_22 = arith.constant 5.000000e-01 : f32
    %49 = vector.broadcast %cst_22 : f32 to vector<1x1xf32>
    %50 = arith.cmpf ogt, %5, %49 : vector<1x1xf32>
    %cst_23 = arith.constant 0.000000e+00 : f32
    %51 = vector.broadcast %cst_23 : f32 to vector<1x1xf32>
    %52 = arith.select %50, %48, %51 : vector<1x1xi1>, vector<1x1xf32>
    %53 = arith.addf %14, %52 : vector<1x1xf32>
    %54 = tpu.iota {dimensions = array<i32: 1>} : vector<1x128xi32>
    %c0_i32_24 = arith.constant 0 : i32
    %55 = vector.broadcast %c0_i32_24 : i32 to vector<1x128xi32>
    %56 = arith.cmpi eq, %54, %55 : vector<1x128xi32>
    %cst_25 = arith.constant 0.000000e+00 : f32
    %57 = vector.shape_cast %53 : vector<1x1xf32> to vector<1x1xf32>
    %58 = vector.broadcast %57 : vector<1x1xf32> to vector<1x128xf32>
    %59 = vector.broadcast %cst_25 : f32 to vector<1x128xf32>
    %60 = arith.select %56, %58, %59 : vector<1x128xi1>, vector<1x128xf32>
    %c0_26 = arith.constant 0 : index
    %c0_27 = arith.constant 0 : index
    %c0_28 = arith.constant 0 : index
    %61 = vector.load %arg4[%c0_26, %c0_27, %c0_28] : memref<1x1x128xf32, #tpu.memory_space<vmem>>, vector<1x1x128xf32>
    %62 = vector.shape_cast %61 : vector<1x1x128xf32> to vector<1x128xf32>
    %63 = vector.shape_cast %60 : vector<1x128xf32> to vector<1x1x128xf32>
    tpu.vector_store %arg4[%c0_26, %c0_27, %c0_28], %63 {strides = array<i32>} : memref<1x1x128xf32, #tpu.memory_space<vmem>>, vector<1x1x128xf32>,
    return
  }
  func.func @transform_0(%arg0: i32, %arg1: memref<2xi32, #tpu.memory_space<smem>>) -> (i32, i32, i32) {
    %c0_i32 = arith.constant 0 : i32
    %c0_i32_0 = arith.constant 0 : i32
    %c0_i32_1 = arith.constant 0 : i32
    return %arg0, %c0_i32, %c0_i32_0 : i32, i32, i32
  }
  func.func @transform_1(%arg0: i32, %arg1: memref<2xi32, #tpu.memory_space<smem>>) -> (i32, i32, i32) {
    %c0_i32 = arith.constant 0 : i32
    %c0_i32_0 = arith.constant 0 : i32
    %c0_i32_1 = arith.constant 0 : i32
    return %arg0, %c0_i32, %c0_i32_0 : i32, i32, i32
  }
  func.func @transform_2(%arg0: i32, %arg1: memref<2xi32, #tpu.memory_space<smem>>) -> (i32, i32, i32) {
    %c0_i32 = arith.constant 0 : i32
    %c0_i32_0 = arith.constant 0 : i32
    %c0_i32_1 = arith.constant 0 : i32
    return %arg0, %c0_i32, %c0_i32_0 : i32, i32, i32
  }
}

</mosaic_0001>

<llo_original>
// kernel: tpu_custom_call.1
$region0: #{tpu_custom_call.1}
  #allocation0 [shape = 'u32[]', space=smem, size = 0x4, offset = 0x4, fixed_abs, tag = 'smem constant byte address 0x4 - core index']
  #allocation1 [shape = 'u32[144,128]{1,0:T(1,128)}', space=vmem, size = 0x12000, scoped, tag = 'internal scratch']
  #allocation2 [shape = 's32[1]{0}', space=sflag, size = 0x4, scoped, tag = 'scoped memory for tpu_custom_call.1']
  #allocation3 [shape = 'u8[512]{0}', space=smem, size = 0x200, scoped, tag = 'prefetched SMEM operand 0']
  %s0 = inlined_call_operand.hbm [shape: s32[2], index: 0, kind: input, shape index: {}]
  %s1 = inlined_call_operand.hbm [shape: f32[2,24,128], index: 1, kind: input, shape index: {}]
  %s2 = inlined_call_operand.hbm [shape: s32[2,8,128], index: 2, kind: input, shape index: {}]
  %s3 = inlined_call_operand.hbm [shape: f32[2,1,128], index: 3, kind: output, shape index: {}]
  %s4 = sld [smem:[#allocation0]]
  $region56: #{tpu_custom_call.1} parent=0
    _
  %s6 = ssub.s32 1, %s4
  %s7 = scalar_select 0, %s6, %s4
  %9 = dma.hbm_to_smem %s0, 16, [#allocation3], [#allocation2]
  %10 = dma.done [#allocation2], 16
  %11 = sfence
  $region1: #{tpu_custom_call.1} parent=0
    #allocation4 [shape = 'u8[24576]{0}', space=vmem, size = 0x6000, scoped, tag = 'input window, operand 1']
    #allocation5 [shape = 's32[2]{0}', space=sflag, size = 0x8, scoped, tag = 'scoped memory for tpu_custom_call.1']
    #allocation6 [shape = 's32[2]{0}', space=sflag, size = 0x8, scoped, tag = 'scoped memory for tpu_custom_call.1']
    #allocation7 [shape = 'u8[8192]{0}', space=vmem, size = 0x2000, scoped, tag = 'input window, operand 2']
    #allocation8 [shape = 's32[2]{0}', space=sflag, size = 0x8, scoped, tag = 'scoped memory for tpu_custom_call.1']
    #allocation9 [shape = 'u8[1024]{0}', space=vmem, size = 0x400, scoped, tag = 'output window, operand 0']
    %12 = vsyncpa [#allocation5], 0
    %s13 = scalar_lea.sflag [#allocation5], 1
    %14 = vsyncpa %s13, 0
    %15 = vsyncpa [#allocation8], 0
    %s16 = scalar_lea.sflag [#allocation8], 1
    %17 = vsyncpa %s16, 0
    %18 = vsyncpa [#allocation6], 0
    %s19 = scalar_lea.sflag [#allocation6], 1
    %20 = vsyncpa %s19, 0
    loop: start=0, step=1, limit=4
    $region2: #{tpu_custom_call.1} parent=1 // loop_pre_header
      _
    $region3: #{tpu_custom_call.1} parent=1 // loop_header
      %s22 = sphi 0, %s26
      %p23 = scmp.ge.s32.totalorder %s22, 4
      %s32 = sphi 0, %s34
      %s35 = sphi 0, %s32
      %s36 = sphi 0, %s35
      %s52 = sphi 0, %s36
      %s58 = sphi 0, %s60
      %s61 = sphi 0, %s58
      %s62 = sphi 0, %s61
      %s78 = sphi 0, %s62
      %s84 = sphi 0, %s86
      %s87 = sphi 0, %s84
      %s88 = sphi 0, %s87
      %s104 = sphi 0, %s88
    $region4: #{tpu_custom_call.1} parent=1 // loop_header_branch
      %25 = sbr.rel (%p23) target = $region8
    $region5: #{tpu_custom_call.1} parent=1 // loop_body
      %s27 = ssub.s32 %s22, 1
      %s28 = ssub.s32 %s22, 2
      %s29 = sadd.s32 %s22, 1
      %s30 = ssub.s32 %s22, %s29
      %p31 = scmp.eq.s32.totalorder %s30, 0
      %s33 = sadd.s32 %s32, 1
      %s34 = scalar_select %p31, %s32, %s33
      %p37 = pneg %p31
      %p38 = scmp.eq.s32.totalorder %s22, 1
      %p39 = por %p37, %p38
      %p40 = scmp.ne.s32.totalorder %s32, %s35
      %p41 = scmp.eq.s32.totalorder %s22, 0
      %p42 = por %p40, %p41
      %p43 = scmp.ne.s32.totalorder %s32, %s35
      %p44 = scmp.eq.s32.totalorder %s27, 1
      %p45 = por %p43, %p44
      %p46 = scmp.ne.s32.totalorder %s35, %s36
      %p47 = scmp.eq.s32.totalorder %s27, 0
      %p48 = por %p46, %p47
      %p49 = scmp.ne.s32.totalorder %s35, %s36
      %p50 = scmp.eq.s32.totalorder %s28, 1
      %p51 = por %p49, %p50
      %p53 = scmp.ne.s32.totalorder %s36, %s52
      %p54 = scmp.eq.s32.totalorder %s28, 0
      %p55 = por %p53, %p54
      %s56 = ssub.s32 %s22, %s29
      %p57 = scmp.eq.s32.totalorder %s56, 0
      %s59 = sadd.s32 %s58, 1
      %s60 = scalar_select %p57, %s58, %s59
      %p63 = pneg %p57
      %p64 = scmp.eq.s32.totalorder %s22, 1
      %p65 = por %p63, %p64
      %p66 = scmp.ne.s32.totalorder %s58, %s61
      %p67 = scmp.eq.s32.totalorder %s22, 0
      %p68 = por %p66, %p67
      %p69 = scmp.ne.s32.totalorder %s58, %s61
      %p70 = scmp.eq.s32.totalorder %s27, 1
      %p71 = por %p69, %p70
      %p72 = scmp.ne.s32.totalorder %s61, %s62
      %p73 = scmp.eq.s32.totalorder %s27, 0
      %p74 = por %p72, %p73
      %p75 = scmp.ne.s32.totalorder %s61, %s62
      %p76 = scmp.eq.s32.totalorder %s28, 1
      %p77 = por %p75, %p76
      %p79 = scmp.ne.s32.totalorder %s62, %s78
      %p80 = scmp.eq.s32.totalorder %s28, 0
      %p81 = por %p79, %p80
      %s82 = ssub.s32 %s22, %s29
      %p83 = scmp.eq.s32.totalorder %s82, 0
      %s85 = sadd.s32 %s84, 1
      %s86 = scalar_select %p83, %s84, %s85
      %p89 = pneg %p83
      %p90 = scmp.eq.s32.totalorder %s22, 1
      %p91 = por %p89, %p90
      %p92 = scmp.ne.s32.totalorder %s84, %s87
      %p93 = scmp.eq.s32.totalorder %s22, 0
      %p94 = por %p92, %p93
      %p95 = scmp.ne.s32.totalorder %s84, %s87
      %p96 = scmp.eq.s32.totalorder %s27, 1
      %p97 = por %p95, %p96
      %p98 = scmp.ne.s32.totalorder %s87, %s88
      %p99 = scmp.eq.s32.totalorder %s27, 0
      %p100 = por %p98, %p99
      %p101 = scmp.ne.s32.totalorder %s87, %s88
      %p102 = scmp.eq.s32.totalorder %s28, 1
      %p103 = por %p101, %p102
      %p105 = scmp.ne.s32.totalorder %s88, %s104
      %p106 = scmp.eq.s32.totalorder %s28, 0
      %p107 = por %p105, %p106
      %p108 = scmp.le.s32.totalorder 1, %s22
      %p109 = scmp.lt.s32.totalorder %s22, 3
      %p110 = pnand %p108, %p109
      %p111 = pneg %p110
      // Predicated region
      $region9: #{tpu_custom_call.1} parent=5 // pred_check
        _
      $region10: #{tpu_custom_call.1} parent=5 // pred_check_branch
        %113 = sbr.rel (%p110) target = $region12
      $region11: #{tpu_custom_call.1} parent=5 // pred_region
        %s114 = ssub.s32 %s22, 1
      $region12: #{tpu_custom_call.1} parent=5 // pred_fallthru
        _
      %p115 = scmp.lt.s32.totalorder %s22, 2
      // Predicated region
      $region13: #{tpu_custom_call.1} parent=5 // pred_check
        %p116 = pneg %p115
      $region14: #{tpu_custom_call.1} parent=5 // pred_check_branch
        %118 = sbr.rel (%p116) target = $region16
      $region15: #{tpu_custom_call.1} parent=5 // pred_region
        // Predicated region
        $region17: #{tpu_custom_call.1} parent=15 // pred_check
          %p119 = pneg %p42
        $region18: #{tpu_custom_call.1} parent=15 // pred_check_branch
          %121 = sbr.rel (%p119) target = $region20
        $region19: #{tpu_custom_call.1} parent=15 // pred_region
          %s122 = sand.u32 %s32, 1
          %s123 = scalar_lea.sflag [#allocation5], %s122
          %s124 = sand.u32 %s32, 1
          %s125 = smul.addr %s124, 24
          %s126 = scalar_lea.vmem [#allocation4], %s125
          %s128 = ssub.s32 384, 384
          %129 = vsyncadd %s123, %s128
          %s130 = smul.addr %s22, 3
          %s131 = smul.addr %s130, 128
          %s132 = scalar_lea.hbm %s1, %s131
          %s133 = sshll.u32 %s126, 4
          %s134 = int_to_ptr.vmem [resolvable:$true] %s133
          %139 = dma.hbm_to_vmem [thread:$0]  %s132, 384, %s134, %s123, 128, 128, 8
        $region20: #{tpu_custom_call.1} parent=15 // pred_fallthru
          _
        // Predicated region
        $region21: #{tpu_custom_call.1} parent=15 // pred_check
          %p140 = pneg %p68
        $region22: #{tpu_custom_call.1} parent=15 // pred_check_branch
          %142 = sbr.rel (%p140) target = $region24
        $region23: #{tpu_custom_call.1} parent=15 // pred_region
          %s143 = sand.u32 %s58, 1
          %s144 = scalar_lea.sflag [#allocation8], %s143
          %s145 = sand.u32 %s58, 1
          %s146 = smul.addr %s145, 8
          %s147 = scalar_lea.vmem [#allocation7], %s146
          %s149 = ssub.s32 128, 128
          %150 = vsyncadd %s144, %s149
          %s151 = smul.addr %s22, 128
          %s152 = scalar_lea.hbm %s2, %s151
          %s154 = sshll.u32 %s147, 4
          %s155 = int_to_ptr.vmem [resolvable:$true] %s154
          %157 = dma.hbm_to_vmem [thread:$0]  %s152, 128, %s155, %s144
        $region24: #{tpu_custom_call.1} parent=15 // pred_fallthru
          _
      $region16: #{tpu_custom_call.1} parent=5 // pred_fallthru
        _
      %p158 = scmp.le.s32.totalorder 1, %s22
      %p159 = scmp.lt.s32.totalorder %s22, 3
      %p160 = pnand %p158, %p159
      %p161 = pneg %p160
      // Predicated region
      $region25: #{tpu_custom_call.1} parent=5 // pred_check
        _
      $region26: #{tpu_custom_call.1} parent=5 // pred_check_branch
        %163 = sbr.rel (%p160) target = $region28
      $region27: #{tpu_custom_call.1} parent=5 // pred_region
        %s164 = ssub.s32 %s22, 1
        %s165 = sand.u32 %s35, 1
        %s166 = scalar_lea.sflag [#allocation5], %s165
        %s167 = sand.u32 %s35, 1
        %s168 = smul.addr %s167, 24
        %s169 = scalar_lea.vmem [#allocation4], %s168
        // Predicated region
        $region29: #{tpu_custom_call.1} parent=27 // pred_check
          %p170 = pneg %p48
        $region30: #{tpu_custom_call.1} parent=27 // pred_check_branch
          %172 = sbr.rel (%p170) target = $region32
        $region31: #{tpu_custom_call.1} parent=27 // pred_region
          %173 = dma.done %s166, 384
        $region32: #{tpu_custom_call.1} parent=27 // pred_fallthru
          _
        %s174 = sand.u32 %s61, 1
        %s175 = scalar_lea.sflag [#allocation8], %s174
        %s176 = sand.u32 %s61, 1
        %s177 = smul.addr %s176, 8
        %s178 = scalar_lea.vmem [#allocation7], %s177
        // Predicated region
        $region33: #{tpu_custom_call.1} parent=27 // pred_check
          %p179 = pneg %p74
        $region34: #{tpu_custom_call.1} parent=27 // pred_check_branch
          %181 = sbr.rel (%p179) target = $region36
        $region35: #{tpu_custom_call.1} parent=27 // pred_region
          %182 = dma.done %s175, 128
        $region36: #{tpu_custom_call.1} parent=27 // pred_fallthru
          _
        %s183 = sand.u32 %s35, 1
        %s184 = scalar_lea.sflag [#allocation5], %s183
        %s185 = sand.u32 %s35, 1
        %s186 = smul.addr %s185, 24
        %s187 = scalar_lea.vmem [#allocation4], %s186
        %p188 = pneg %p48
        %p189 = pneg %p45
        %s190 = sand.u32 %s61, 1
        %s191 = scalar_lea.sflag [#allocation8], %s190
        %s192 = sand.u32 %s61, 1
        %s193 = smul.addr %s192, 8
        %s194 = scalar_lea.vmem [#allocation7], %s193
        %p195 = pneg %p74
        %p196 = pneg %p71
        %p197 = pneg %p100
        %p198 = pneg %p97
        %s199 = sand.u32 %s87, 1
        %s200 = scalar_lea.sflag [#allocation6], %s199
        %s201 = sand.u32 %s87, 1
        %s202 = scalar_lea.vmem [#allocation9], %s201
        %s203 = sld [smem:[#allocation3 + %s27]]
        %s204 = scvt.s32.f32 %s203
        %v205 = vstv %s204
        %v206 = vadd.f32 %v205, 0.0
        %v207 = vld [vmem:[%s169] sm:$0xff]
        %v208 = vld [vmem:[%s169 + $0x10] sm:$0xff]
        %v209 = vmul.f32 %v207, %v208
        %210 = vadd.xlane.f32.xlu0 %v209
        %v211 = vpop.xlane.xlu0 %210
        %v212 = vrot.slane %v211, 4
        %v213 = vadd.f32 %v211, %v212
        %v214 = vrot.slane %v213, 2
        %v215 = vadd.f32 %v213, %v214
        %v216 = vrot.slane %v215, 1
        %v217 = vadd.f32 %v215, %v216
        loop: start=0, step=1, limit=32
        $region37: #{tpu_custom_call.1} parent=27 // loop_pre_header
          _
        $region38: #{tpu_custom_call.1} parent=27 // loop_header
          %s219 = sphi 0, %s223
          %p220 = scmp.ge.s32.totalorder %s219, 32
          %v224 = vphi 0, %v242
          %v225 = vphi 2139095039, %v243
        $region39: #{tpu_custom_call.1} parent=27 // loop_header_branch
          %222 = sbr.rel (%p220) target = $region43
        $region40: #{tpu_custom_call.1} parent=27 // loop_body
          %v226 = vsub.s32 %v225, %v224
          %v227 = vshra.s32 %v226, 1
          %v228 = vadd.s32 %v224, %v227
          %v229 = vld [vmem:[%s178] sm:$0xff]
          %vm230 = vcmp.gt.s32.totalorder %v229, %v228
          %v231 = vsel %vm230, 1.0, 0.0
          %232 = vadd.xlane.f32.xlu0 %v231
          %v233 = vpop.xlane.xlu0 %232
          %v234 = vrot.slane %v233, 4
          %v235 = vadd.f32 %v233, %v234
          %v236 = vrot.slane %v235, 2
          %v237 = vadd.f32 %v235, %v236
          %v238 = vrot.slane %v237, 1
          %v239 = vadd.f32 %v237, %v238
          %vm240 = vcmp.lt.f32.partialorder %v239, %v206
          %v241 = vadd.s32 %v228, 1
          %v242 = vsel %vm240, %v224, %v241
          %v243 = vsel %vm240, %v228, %v225
        $region41: #{tpu_custom_call.1} parent=27 // loop_footer
          %s223 = sadd.s32 1, %s219
        $region42: #{tpu_custom_call.1} parent=27 // loop_footer_branch
          %218 = sbr.rel target = $region38
        $region43: #{tpu_custom_call.1} parent=27 // loop_exit
          _
        %v244 = vld [vmem:[%s169 + $0x8] sm:$0xff]
        %v245 = vld [vmem:[%s178] sm:$0xff]
        %vm246 = vcmp.gt.s32.totalorder %v245, %v225
        %v247 = vsel %vm246, 1.0, 0.0
        %248 = vadd.xlane.f32.xlu0 %v247
        %v249 = vpop.xlane.xlu0 %248
        %v250 = vrot.slane %v249, 4
        %v251 = vadd.f32 %v249, %v250
        %v252 = vrot.slane %v251, 2
        %v253 = vadd.f32 %v251, %v252
        %v254 = vrot.slane %v253, 1
        %v255 = vadd.f32 %v253, %v254
        %v256 = vsel %vm246, %v244, 0.0
        %257 = vadd.xlane.f32.xlu0 %v256
        %v258 = vpop.xlane.xlu0 %257
        %v259 = vrot.slane %v258, 4
        %v260 = vadd.f32 %v258, %v259
        %v261 = vrot.slane %v260, 2
        %v262 = vadd.f32 %v260, %v261
        %v263 = vrot.slane %v262, 1
        %v264 = vadd.f32 %v262, %v263
        %vm265 = vcmp.eq.s32.totalorder %v245, %v225
        %v266 = vsel %vm265, %v244, 0.0
        %267 = vmax.xlane.f32.xlu0 %v266
        %v268 = vpop.xlane.xlu0 %267
        %v269 = vrot.slane %v268, 4
        %v270 = vmax.f32 %v268, %v269
        %v271 = vrot.slane %v270, 2
        %v272 = vmax.f32 %v270, %v271
        %v273 = vrot.slane %v272, 1
        %v274 = vmax.f32 %v272, %v273
        %v275 = vsub.f32 %v206, %v255
        %v276 = vmul.f32 %v275, %v274
        %v277 = vadd.f32 %v264, %v276
        %vm278 = vcmp.gt.f32.partialorder %v206, 0.5
        %v279 = vsel %vm278, %v277, 0.0
        %v280 = vadd.f32 %v217, %v279
        %v281 = vlaneseq
        %v282 = vand.u32 %v281, 127
        %vm283 = vcmp.eq.s32.totalorder %v282, 0
        %v284 = vsel %vm283, %v280, 0.0
        %285 = vst [vmem:[%s202] sm:$0x1] %v284
        %s286 = sand.u32 %s87, 1
        %s287 = scalar_lea.sflag [#allocation6], %s286
        %s288 = sand.u32 %s87, 1
        %s289 = scalar_lea.vmem [#allocation9], %s288
        // Predicated region
        $region44: #{tpu_custom_call.1} parent=27 // pred_check
          %p290 = pneg %p97
        $region45: #{tpu_custom_call.1} parent=27 // pred_check_branch
          %292 = sbr.rel (%p290) target = $region47
        $region46: #{tpu_custom_call.1} parent=27 // pred_region
          %s294 = ssub.s32 16, 16
          %295 = vsyncadd %s287, %s294
          %s296 = smul.addr %s27, 16
          %s297 = scalar_lea.hbm %s3, %s296
          %s299 = sshll.u32 %s289, 4
          %s300 = int_to_ptr.vmem [resolvable:$true] %s299
          %302 = dma.vmem_to_hbm [thread:$0]  %s300, 16, %s297, %s287
        $region47: #{tpu_custom_call.1} parent=27 // pred_fallthru
          _
      $region28: #{tpu_custom_call.1} parent=5 // pred_fallthru
        _
      %p303 = scmp.le.s32.totalorder 2, %s22
      // Predicated region
      $region48: #{tpu_custom_call.1} parent=5 // pred_check
        %p304 = pneg %p303
      $region49: #{tpu_custom_call.1} parent=5 // pred_check_branch
        %306 = sbr.rel (%p304) target = $region51
      $region50: #{tpu_custom_call.1} parent=5 // pred_region
        %s307 = ssub.s32 %s22, 2
        // Predicated region
        $region52: #{tpu_custom_call.1} parent=50 // pred_check
          %p308 = pneg %p103
        $region53: #{tpu_custom_call.1} parent=50 // pred_check_branch
          %310 = sbr.rel (%p308) target = $region55
        $region54: #{tpu_custom_call.1} parent=50 // pred_region
          %s311 = sand.u32 %s88, 1
          %s312 = scalar_lea.sflag [#allocation6], %s311
          %s313 = sand.u32 %s88, 1
          %s314 = scalar_lea.vmem [#allocation9], %s313
          %315 = dma.done %s312, 16
        $region55: #{tpu_custom_call.1} parent=50 // pred_fallthru
          _
      $region51: #{tpu_custom_call.1} parent=5 // pred_fallthru
        _
    $region6: #{tpu_custom_call.1} parent=1 // loop_footer
      %s26 = sadd.s32 1, %s22
    $region7: #{tpu_custom_call.1} parent=1 // loop_footer_branch
      %21 = sbr.rel target = $region3
    $region8: #{tpu_custom_call.1} parent=1 // loop_exit
      _
    %316 = vsyncpa [#allocation5], 1
    %s317 = scalar_lea.sflag [#allocation5], 1
    %318 = vsyncpa %s317, 1
    %319 = vsyncpa [#allocation8], 1
    %s320 = scalar_lea.sflag [#allocation8], 1
    %321 = vsyncpa %s320, 1
    %322 = vsyncpa [#allocation6], 1
    %s323 = scalar_lea.sflag [#allocation6], 1
    %324 = vsyncpa %s323, 1

</llo_original>
